<compile_context>
chip_gen: v5e
topology: v5e:2x2
jax: 0.10.0
libtpu: 0.0.40
codegen_flags: <defaults>
</compile_context>

<pallas_src>
import math

import jax
import jax.numpy as jnp
from jax.experimental import pallas as pl
from jax.experimental.pallas import tpu as pltpu


def lstmcells_kernel(x_ref, pack_ref, out_ref):
    """x_ref:(TB, D_pad)  pack_ref:(D_pad + 4*4H + 8, 8H)  out_ref:(TB, 4H).

    Mega-pack row layout:
        [0, D_pad)         W1 gate-slab weights (cell 1; rows >= D_in are zero)
        [+4H)              W2 (cell 2; rows >= H are zero)
        [+4H)              W3 (cell 3; rows >= H are zero)
        [+4H)              Wlin (col 0 real; only the first 4H cols are used)
        [+4H)              P: band1 -> band0 permutation (only the first 4H cols are used)
        [+8)               biases: rows 0..2 = cell biases (width 8H), row 3 = blin (col 0)
    Gate-slab columns (width 8H): [0,4H) -> sigmoid block (i in band0, o in band1),
                                  [4H,8H) -> tanh block (g in band0); all other columns are zero.
    """
    d_pad = x_ref.shape[1]
    h4 = out_ref.shape[1]             # 4H (128 for window_size=32)
    r_w2 = d_pad
    r_w3 = d_pad + h4
    r_lin = d_pad + 2 * h4
    r_perm = d_pad + 3 * h4
    r_b = d_pad + 4 * h4

    perm = pack_ref[r_perm:r_perm + h4, 0:h4]     # (4H, 4H): moves sigma(o) band1 -> band0
    bias = pack_ref[r_b:r_b + 8, :]               # (8, 8H): one aligned load, rows sliced below

    def cell(inp, w, b):
        gates = jnp.dot(inp, w, preferred_element_type=jnp.float32) + b   # (TB, 8H)
        sig = jax.nn.sigmoid(gates[:, 0:h4])      # band0 = i, band1 = o          (EUP)
        tg = jnp.tanh(gates[:, h4:2 * h4])        # band0 = g, bands 1..3 exactly 0 (EUP)
        c = sig * tg                              # band0 = i*g = c, elsewhere exactly 0
        o_al = jnp.dot(sig, perm, preferred_element_type=jnp.float32)     # band0 = o, else 0 (MXU)
        return o_al * jnp.tanh(c)                 # band0 = h, elsewhere exactly 0

    h1 = cell(x_ref[...], pack_ref[0:r_w2, :], bias[0:1, :])
    h2 = cell(h1, pack_ref[r_w2:r_w3, :], bias[1:2, :])
    h3 = cell(h2, pack_ref[r_w3:r_lin, :], bias[2:3, :])

    out = (jnp.dot(h3, pack_ref[r_lin:r_lin + h4, 0:h4],
                   preferred_element_type=jnp.float32)
           + bias[3:4, 0:h4])
    out_ref[...] = out.astype(out_ref.dtype)


def lstmcells_forward(x, params):
    """x: (B, 1, input_dim) float32  ->  (B, 1) float32."""
    x2d = jnp.squeeze(x, axis=1).astype(jnp.float32)     # mirrors input_tensor.squeeze(1)
    (wih1, whh1, bih1, bhh1,
     wih2, whh2, bih2, bhh2,
     wih3, whh3, bih3, bhh3,
     wlin, blin) = params

    H = whh1.shape[1]
    H4 = 4 * H
    G = 2 * H4                       # per-cell gate-slab width (sigmoid block | tanh block)
    D_in = wih1.shape[1]
    B = x2d.shape[0]

    def rup(n, m):
        return ((n + m - 1) // m) * m

    D_pad = max(H4, rup(D_in, 8))    # lane width of x / row count of the W1 block

    # ---- host-side packing (done once per call; weights only) -----------------------------
    def wide_cell_weights(w_ih, b_ih, b_hh, rows):
        # PyTorch gate order along w_ih rows: [i, f, g, o], each H wide.
        wt = w_ih.T.astype(jnp.float32)               # (D, 4H)
        b = (b_ih + b_hh).astype(jnp.float32)         # (4H,)
        wi, wg, wo = wt[:, 0:H], wt[:, 2 * H:3 * H], wt[:, 3 * H:4 * H]
        bi, bg, bo = b[0:H], b[2 * H:3 * H], b[3 * H:4 * H]
        d = wt.shape[0]
        w_wide = jnp.zeros((rows, G), jnp.float32)
        w_wide = w_wide.at[:d, 0:H].set(wi)           # sigmoid block, band0 = i
        w_wide = w_wide.at[:d, H:2 * H].set(wo)       # sigmoid block, band1 = o
        w_wide = w_wide.at[:d, H4:H4 + H].set(wg)     # tanh block,   band0 = g
        b_wide = jnp.zeros((G,), jnp.float32)
        b_wide = b_wide.at[0:H].set(bi).at[H:2 * H].set(bo).at[H4:H4 + H].set(bg)
        return w_wide, b_wide

    w1w, b1w = wide_cell_weights(wih1, bih1, bhh1, D_pad)   # (D_pad, 8H)
    w2w, b2w = wide_cell_weights(wih2, bih2, bhh2, H4)      # (4H, 8H), rows >= H zero
    w3w, b3w = wide_cell_weights(wih3, bih3, bhh3, H4)

    # Linear(H,1): real weights in column 0 of rows [0,H); everything else zero.
    wlinw = jnp.zeros((H4, G), jnp.float32).at[:H, 0].set(wlin[0].astype(jnp.float32))
    # band1 -> band0 permutation: P[H+j, j] = 1 for j < H.
    permw = jnp.zeros((H4, G), jnp.float32).at[H:2 * H, 0:H].set(jnp.eye(H, dtype=jnp.float32))

    blinw = jnp.zeros((G,), jnp.float32).at[0].set(blin[0].astype(jnp.float32))
    b_block = (jnp.zeros((8, G), jnp.float32)
               .at[0].set(b1w).at[1].set(b2w).at[2].set(b3w).at[3].set(blinw))

    pack = jnp.concatenate([w1w, w2w, w3w, wlinw, permw, b_block], axis=0)
    pack_rows = D_pad + 4 * H4 + 8

    # ---- batch tiling ----------------------------------------------------------------------
    B8 = rup(B, 8)
    # >= 2 grid steps whenever possible (keeps both v7x TensorCores busy); cap tile at 1024 rows
    # (all buffers stay far below the 32 MiB scoped-VMEM default on every generation incl. v7x).
    n_tiles = max(2, pl.cdiv(B8, 1024)) if B8 >= 16 else 1
    TB = rup(pl.cdiv(B8, n_tiles), 8)
    B_pad = rup(B8, TB)

    x_pad = jnp.zeros((B_pad, D_pad), jnp.float32).at[:B, :D_in].set(x2d)

    out = pl.pallas_call(
        lstmcells_kernel,
        out_shape=jax.ShapeDtypeStruct((B_pad, H4), jnp.float32),
        grid=(B_pad // TB,),
        in_specs=[
            pl.BlockSpec((TB, D_pad), lambda i: (i, 0)),        # pipelined over the batch
            pl.BlockSpec((pack_rows, G), lambda i: (0, 0)),     # weights: VMEM-resident
        ],
        out_specs=pl.BlockSpec((TB, H4), lambda i: (i, 0)),     # lane-dense output slab
        compiler_params=pltpu.CompilerParams(
            dimension_semantics=("parallel",)),
    )(x_pad, pack)

    return out[:B, :1]


def init_params(key, input_dim, window_size, output_nodes=1):
    """Deterministic init mirroring PyTorch LSTMCell/Linear shapes (uniform(-k, k))."""
    def uni(k, shape, bound):
        return jax.random.uniform(k, shape, jnp.float32, minval=-bound, maxval=bound)

    keys = jax.random.split(key, 14)
    kb = 1.0 / math.sqrt(window_size)
    params = (
        # lstm1: input_dim -> window_size
        uni(keys[0], (4 * window_size, input_dim), kb),
        uni(keys[1], (4 * window_size, window_size), kb),
        uni(keys[2], (4 * window_size,), kb),
        uni(keys[3], (4 * window_size,), kb),
        # lstm2: window_size -> window_size
        uni(keys[4], (4 * window_size, window_size), kb),
        uni(keys[5], (4 * window_size, window_size), kb),
        uni(keys[6], (4 * window_size,), kb),
        uni(keys[7], (4 * window_size,), kb),
        # lstm3: window_size -> window_size
        uni(keys[8], (4 * window_size, window_size), kb),
        uni(keys[9], (4 * window_size, window_size), kb),
        uni(keys[10], (4 * window_size,), kb),
        uni(keys[11], (4 * window_size,), kb),
        # linear: window_size -> 1
        uni(keys[12], (output_nodes, window_size), kb),
        uni(keys[13], (output_nodes,), kb),
    )
    return params


def reference_forward(x, params):
    """Pure-JAX reference of the PyTorch forward (for correctness check)."""
    (wih1, whh1, bih1, bhh1,
     wih2, whh2, bih2, bhh2,
     wih3, whh3, bih3, bhh3,
     wlin, blin) = params
    xt = jnp.squeeze(x, axis=1)
    B = xt.shape[0]

    def cell(inp, h, c, wih, whh, bih, bhh):
        H = whh.shape[1]
        gates = inp @ wih.T + bih + h @ whh.T + bhh
        i = jax.nn.sigmoid(gates[:, 0 * H:1 * H])
        f = jax.nn.sigmoid(gates[:, 1 * H:2 * H])
        g = jnp.tanh(gates[:, 2 * H:3 * H])
        o = jax.nn.sigmoid(gates[:, 3 * H:4 * H])
        c_n = f * c + i * g
        return o * jnp.tanh(c_n), c_n

    H1 = whh1.shape[1]
    z = jnp.zeros((B, H1), jnp.float32)
    h1, _ = cell(xt, z, z, wih1, whh1, bih1, bhh1)
    h2, _ = cell(h1, z, z, wih2, whh2, bih2, bhh2)
    h3, _ = cell(h2, z, z, wih3, whh3, bih3, bhh3)
    return h3 @ wlin.T + blin


if __name__ == "__main__":
    # Module hyper-params (forward only uses input_dim and window_size).
    batch_size = 4
    input_dim = 16
    window_size = 32       # hidden size of all three LSTM cells

    key = jax.random.PRNGKey(0)
    k_x, k_p = jax.random.split(key)
    x = jax.random.normal(k_x, (batch_size, 1, input_dim), dtype=jnp.float32)
    params = init_params(k_p, input_dim, window_size)

    out = lstmcells_forward(x, params)
    out = jax.block_until_ready(out)

    ref = reference_forward(x, params)
    assert out.shape == (batch_size, 1)
    assert jnp.allclose(out, ref, atol=1e-4, rtol=1e-4), (out, ref)

    print("KERNEL_OK")
</pallas_src>

<mosaic_0001>
module attributes {stable_mosaic.version = 11 : i64} {
  func.func @lstmcells_kernel(%arg0: i32, %arg1: memref<8x128xf32, #tpu.memory_space<vmem>>, %arg2: memref<648x256xf32, #tpu.memory_space<vmem>>, %arg3: memref<8x128xf32, #tpu.memory_space<vmem>>) attributes {dimension_semantics = [#tpu.dimension_semantics<parallel>], iteration_bounds = array<i64: 1>, scalar_prefetch = 0 : i64, scratch_operands = 0 : i64, tpu.core_type = #tpu.core_type<tc>, window_params = [{transform_indices = @transform_0, window_bounds = array<i64: 8, 128>}, {pipeline_mode = #tpu.pipeline_mode<synchronous>, transform_indices = @transform_1, window_bounds = array<i64: 648, 256>}, {transform_indices = @transform_2, window_bounds = array<i64: 8, 128>}]} {
    %c512 = arith.constant 512 : index
    %c0 = arith.constant 0 : index
    %0 = vector.load %arg2[%c512, %c0] : memref<648x256xf32, #tpu.memory_space<vmem>>, vector<128x128xf32>
    %c640 = arith.constant 640 : index
    %c0_0 = arith.constant 0 : index
    %1 = vector.load %arg2[%c640, %c0_0] : memref<648x256xf32, #tpu.memory_space<vmem>>, vector<8x256xf32>
    %c0_1 = arith.constant 0 : index
    %c0_2 = arith.constant 0 : index
    %2 = vector.load %arg1[%c0_1, %c0_2] : memref<8x128xf32, #tpu.memory_space<vmem>>, vector<8x128xf32>
    %c0_3 = arith.constant 0 : index
    %c0_4 = arith.constant 0 : index
    %3 = vector.load %arg2[%c0_3, %c0_4] : memref<648x256xf32, #tpu.memory_space<vmem>>, vector<128x256xf32>
    %4 = vector.extract_strided_slice %1 {offsets = [0, 0], sizes = [1, 256], strides = [1, 1]} : vector<8x256xf32> to vector<1x256xf32>
    %cst = arith.constant dense<0.000000e+00> : vector<8x256xf32>
    %5 = tpu.matmul %2, %3, %cst {dimension_numbers = #tpu.dot_dimension_numbers<[1], [0], [0], [1], [0, 0, 1, 1], [], []>} : vector<8x128xf32>, vector<128x256xf32>, vector<8x256xf32> -> vector<8x256xf32>
    %6 = vector.broadcast %4 : vector<1x256xf32> to vector<8x256xf32>
    %7 = arith.addf %5, %6 : vector<8x256xf32>
    %8 = vector.extract_strided_slice %7 {offsets = [0, 0], sizes = [8, 128], strides = [1, 1]} : vector<8x256xf32> to vector<8x128xf32>
    %9 = arith.negf %8 : vector<8x128xf32>
    %10 = math.exp %9 : vector<8x128xf32>
    %cst_5 = arith.constant 1.000000e+00 : f32
    %11 = vector.broadcast %cst_5 : f32 to vector<8x128xf32>
    %12 = arith.addf %11, %10 : vector<8x128xf32>
    %13 = arith.divf %11, %12 : vector<8x128xf32>
    %14 = vector.extract_strided_slice %7 {offsets = [0, 128], sizes = [8, 128], strides = [1, 1]} : vector<8x256xf32> to vector<8x128xf32>
    %15 = math.tanh %14 : vector<8x128xf32>
    %16 = arith.mulf %13, %15 : vector<8x128xf32>
    %cst_6 = arith.constant dense<0.000000e+00> : vector<8x128xf32>
    %17 = tpu.matmul %13, %0, %cst_6 {dimension_numbers = #tpu.dot_dimension_numbers<[1], [0], [0], [1], [0, 0, 1, 1], [], []>} : vector<8x128xf32>, vector<128x128xf32>, vector<8x128xf32> -> vector<8x128xf32>
    %18 = math.tanh %16 : vector<8x128xf32>
    %19 = arith.mulf %17, %18 : vector<8x128xf32>
    %c128 = arith.constant 128 : index
    %c0_7 = arith.constant 0 : index
    %20 = vector.load %arg2[%c128, %c0_7] : memref<648x256xf32, #tpu.memory_space<vmem>>, vector<128x256xf32>
    %21 = vector.extract_strided_slice %1 {offsets = [1, 0], sizes = [1, 256], strides = [1, 1]} : vector<8x256xf32> to vector<1x256xf32>
    %cst_8 = arith.constant dense<0.000000e+00> : vector<8x256xf32>
    %22 = tpu.matmul %19, %20, %cst_8 {dimension_numbers = #tpu.dot_dimension_numbers<[1], [0], [0], [1], [0, 0, 1, 1], [], []>} : vector<8x128xf32>, vector<128x256xf32>, vector<8x256xf32> -> vector<8x256xf32>
    %23 = vector.broadcast %21 : vector<1x256xf32> to vector<8x256xf32>
    %24 = arith.addf %22, %23 : vector<8x256xf32>
    %25 = vector.extract_strided_slice %24 {offsets = [0, 0], sizes = [8, 128], strides = [1, 1]} : vector<8x256xf32> to vector<8x128xf32>
    %26 = arith.negf %25 : vector<8x128xf32>
    %27 = math.exp %26 : vector<8x128xf32>
    %cst_9 = arith.constant 1.000000e+00 : f32
    %28 = vector.broadcast %cst_9 : f32 to vector<8x128xf32>
    %29 = arith.addf %28, %27 : vector<8x128xf32>
    %30 = arith.divf %28, %29 : vector<8x128xf32>
    %31 = vector.extract_strided_slice %24 {offsets = [0, 128], sizes = [8, 128], strides = [1, 1]} : vector<8x256xf32> to vector<8x128xf32>
    %32 = math.tanh %31 : vector<8x128xf32>
    %33 = arith.mulf %30, %32 : vector<8x128xf32>
    %cst_10 = arith.constant dense<0.000000e+00> : vector<8x128xf32>
    %34 = tpu.matmul %30, %0, %cst_10 {dimension_numbers = #tpu.dot_dimension_numbers<[1], [0], [0], [1], [0, 0, 1, 1], [], []>} : vector<8x128xf32>, vector<128x128xf32>, vector<8x128xf32> -> vector<8x128xf32>
    %35 = math.tanh %33 : vector<8x128xf32>
    %36 = arith.mulf %34, %35 : vector<8x128xf32>
    %c256 = arith.constant 256 : index
    %c0_11 = arith.constant 0 : index
    %37 = vector.load %arg2[%c256, %c0_11] : memref<648x256xf32, #tpu.memory_space<vmem>>, vector<128x256xf32>
    %38 = vector.extract_strided_slice %1 {offsets = [2, 0], sizes = [1, 256], strides = [1, 1]} : vector<8x256xf32> to vector<1x256xf32>
    %cst_12 = arith.constant dense<0.000000e+00> : vector<8x256xf32>
    %39 = tpu.matmul %36, %37, %cst_12 {dimension_numbers = #tpu.dot_dimension_numbers<[1], [0], [0], [1], [0, 0, 1, 1], [], []>} : vector<8x128xf32>, vector<128x256xf32>, vector<8x256xf32> -> vector<8x256xf32>
    %40 = vector.broadcast %38 : vector<1x256xf32> to vector<8x256xf32>
    %41 = arith.addf %39, %40 : vector<8x256xf32>
    %42 = vector.extract_strided_slice %41 {offsets = [0, 0], sizes = [8, 128], strides = [1, 1]} : vector<8x256xf32> to vector<8x128xf32>
    %43 = arith.negf %42 : vector<8x128xf32>
    %44 = math.exp %43 : vector<8x128xf32>
    %cst_13 = arith.constant 1.000000e+00 : f32
    %45 = vector.broadcast %cst_13 : f32 to vector<8x128xf32>
    %46 = arith.addf %45, %44 : vector<8x128xf32>
    %47 = arith.divf %45, %46 : vector<8x128xf32>
    %48 = vector.extract_strided_slice %41 {offsets = [0, 128], sizes = [8, 128], strides = [1, 1]} : vector<8x256xf32> to vector<8x128xf32>
    %49 = math.tanh %48 : vector<8x128xf32>
    %50 = arith.mulf %47, %49 : vector<8x128xf32>
    %cst_14 = arith.constant dense<0.000000e+00> : vector<8x128xf32>
    %51 = tpu.matmul %47, %0, %cst_14 {dimension_numbers = #tpu.dot_dimension_numbers<[1], [0], [0], [1], [0, 0, 1, 1], [], []>} : vector<8x128xf32>, vector<128x128xf32>, vector<8x128xf32> -> vector<8x128xf32>
    %52 = math.tanh %50 : vector<8x128xf32>
    %53 = arith.mulf %51, %52 : vector<8x128xf32>
    %c384 = arith.constant 384 : index
    %c0_15 = arith.constant 0 : index
    %54 = vector.load %arg2[%c384, %c0_15] : memref<648x256xf32, #tpu.memory_space<vmem>>, vector<128x128xf32>
    %cst_16 = arith.constant dense<0.000000e+00> : vector<8x128xf32>
    %55 = tpu.matmul %53, %54, %cst_16 {dimension_numbers = #tpu.dot_dimension_numbers<[1], [0], [0], [1], [0, 0, 1, 1], [], []>} : vector<8x128xf32>, vector<128x128xf32>, vector<8x128xf32> -> vector<8x128xf32>
    %56 = vector.extract_strided_slice %1 {offsets = [3, 0], sizes = [1, 128], strides = [1, 1]} : vector<8x256xf32> to vector<1x128xf32>
    %57 = vector.broadcast %56 : vector<1x128xf32> to vector<8x128xf32>
    %58 = arith.addf %55, %57 : vector<8x128xf32>
    %c0_17 = arith.constant 0 : index
    %c0_18 = arith.constant 0 : index
    %59 = vector.load %arg3[%c0_17, %c0_18] : memref<8x128xf32, #tpu.memory_space<vmem>>, vector<8x128xf32>
    tpu.vector_store %arg3[%c0_17, %c0_18], %58 {strides = array<i32>} : memref<8x128xf32, #tpu.memory_space<vmem>>, vector<8x128xf32>,
    return
  }
  func.func @transform_0(%arg0: i32) -> (i32, i32) {
    %c0_i32 = arith.constant 0 : i32
    %c0_i32_0 = arith.constant 0 : i32
    return %arg0, %c0_i32 : i32, i32
  }
  func.func @transform_1(%arg0: i32) -> (i32, i32) {
    %c0_i32 = arith.constant 0 : i32
    %c0_i32_0 = arith.constant 0 : i32
    %c0_i32_1 = arith.constant 0 : i32
    return %c0_i32, %c0_i32_0 : i32, i32
  }
  func.func @transform_2(%arg0: i32) -> (i32, i32) {
    %c0_i32 = arith.constant 0 : i32
    %c0_i32_0 = arith.constant 0 : i32
    return %arg0, %c0_i32 : i32, i32
  }
}

</mosaic_0001>

<llo_original>
// kernel: tpu_custom_call.1
$region0: #{tpu_custom_call.1}
  #allocation0 [shape = 'u32[]', space=smem, size = 0x4, offset = 0x4, fixed_abs, tag = 'smem constant byte address 0x4 - core index']
  #allocation1 [shape = 'u32[72,128]{1,0:T(1,128)}', space=vmem, size = 0x9000, scoped, tag = 'internal scratch']
  %s0 = inlined_call_operand.hbm [shape: f32[8,128], index: 0, kind: input, shape index: {}]
  %s1 = inlined_call_operand.hbm [shape: f32[648,256], index: 1, kind: input, shape index: {}]
  %s2 = inlined_call_operand.hbm [shape: f32[8,128], index: 2, kind: output, shape index: {}]
  %s3 = sld [smem:[#allocation0]]
  $region26: #{tpu_custom_call.1} parent=0
    _
  %s5 = ssub.s32 1, %s3
  %s6 = scalar_select 0, %s5, %s3
  $region1: #{tpu_custom_call.1} parent=0
    #allocation2 [shape = 'u8[4096]{0}', space=vmem, size = 0x1000, scoped, tag = 'input window, operand 0, single buffered']
    #allocation3 [shape = 's32[1]{0}', space=sflag, size = 0x4, scoped, tag = 'scoped memory for tpu_custom_call.1']
    #allocation4 [shape = 's32[1]{0}', space=sflag, size = 0x4, scoped, tag = 'scoped memory for tpu_custom_call.1']
    #allocation5 [shape = 'u8[663552]{0}', space=vmem, size = 0xa2000, scoped, tag = 'input window, operand 1, single buffered']
    #allocation6 [shape = 's32[1]{0}', space=sflag, size = 0x4, scoped, tag = 'scoped memory for tpu_custom_call.1']
    #allocation7 [shape = 'u8[4096]{0}', space=vmem, size = 0x1000, scoped, tag = 'output window, operand 0, single buffered']
    %7 = vsyncpa [#allocation3], 0
    %8 = vsyncpa [#allocation6], 0
    %9 = vsyncpa [#allocation4], 0
    // Predicated region
    $region2: #{tpu_custom_call.1} parent=1 // pred_check
      _
    $region3: #{tpu_custom_call.1} parent=1 // pred_check_branch
      %11 = sbr.rel (0) target = $region5
    $region4: #{tpu_custom_call.1} parent=1 // pred_region
      %13 = vsyncadd [#allocation3], 0
      %s15 = sshll.u32 %s0, 4
      %s16 = int_to_ptr.hbm [resolvable:$true] %s15
      %s17 = sshll.u32 [#allocation2], 4
      %s18 = int_to_ptr.vmem [resolvable:$true] %s17
      %20 = dma.hbm_to_vmem [thread:$0]  %s16, 128, %s18, [#allocation3]
    $region5: #{tpu_custom_call.1} parent=1 // pred_fallthru
      _
    // Predicated region
    $region6: #{tpu_custom_call.1} parent=1 // pred_check
      _
    $region7: #{tpu_custom_call.1} parent=1 // pred_check_branch
      %22 = sbr.rel (0) target = $region9
    $region8: #{tpu_custom_call.1} parent=1 // pred_region
      %24 = vsyncadd [#allocation6], 0
      %s25 = sshll.u32 %s1, 4
      %s26 = int_to_ptr.hbm [resolvable:$true] %s25
      %s27 = sshll.u32 [#allocation5], 4
      %s28 = int_to_ptr.vmem [resolvable:$true] %s27
      %33 = dma.hbm_to_vmem [thread:$0]  %s26, 20736, %s28, [#allocation6], 256, 256, 16
    $region9: #{tpu_custom_call.1} parent=1 // pred_fallthru
      _
    // Predicated region
    $region10: #{tpu_custom_call.1} parent=1 // pred_check
      _
    $region11: #{tpu_custom_call.1} parent=1 // pred_check_branch
      %35 = sbr.rel (0) target = $region13
    $region12: #{tpu_custom_call.1} parent=1 // pred_region
      %37 = dma.done [#allocation3], 128
    $region13: #{tpu_custom_call.1} parent=1 // pred_fallthru
      _
    // Predicated region
    $region14: #{tpu_custom_call.1} parent=1 // pred_check
      _
    $region15: #{tpu_custom_call.1} parent=1 // pred_check_branch
      %39 = sbr.rel (0) target = $region17
    $region16: #{tpu_custom_call.1} parent=1 // pred_region
      %41 = dma.done [#allocation6], 20736
    $region17: #{tpu_custom_call.1} parent=1 // pred_fallthru
      _
    %v42 = vld [vmem:[#allocation5 + $0x400] sm:$0xff]
    %v43 = vld [vmem:[#allocation5 + $0x410] sm:$0xff]
    %v44 = vld [vmem:[#allocation5 + $0x420] sm:$0xff]
    %v45 = vld [vmem:[#allocation5 + $0x430] sm:$0xff]
    %v46 = vld [vmem:[#allocation5 + $0x440] sm:$0xff]
    %v47 = vld [vmem:[#allocation5 + $0x450] sm:$0xff]
    %v48 = vld [vmem:[#allocation5 + $0x460] sm:$0xff]
    %v49 = vld [vmem:[#allocation5 + $0x470] sm:$0xff]
    %v50 = vld [vmem:[#allocation5 + $0x480] sm:$0xff]
    %v51 = vld [vmem:[#allocation5 + $0x490] sm:$0xff]
    %v52 = vld [vmem:[#allocation5 + $0x4a0] sm:$0xff]
    %v53 = vld [vmem:[#allocation5 + $0x4b0] sm:$0xff]
    %v54 = vld [vmem:[#allocation5 + $0x4c0] sm:$0xff]
    %v55 = vld [vmem:[#allocation5 + $0x4d0] sm:$0xff]
    %v56 = vld [vmem:[#allocation5 + $0x4e0] sm:$0xff]
    %v57 = vld [vmem:[#allocation5 + $0x4f0] sm:$0xff]
    %v58 = vld [vmem:[#allocation5 + $0x500] sm:$0xff]
    %v59 = vld [vmem:[#allocation5 + $0x508] sm:$0xff]
    %v60 = vld [vmem:[#allocation2] sm:$0xff]
    %v61 = vld [vmem:[#allocation5] sm:$0xff]
    %v62 = vld [vmem:[#allocation5 + $0x8] sm:$0xff]
    %v63 = vld [vmem:[#allocation5 + $0x10] sm:$0xff]
    %v64 = vld [vmem:[#allocation5 + $0x18] sm:$0xff]
    %v65 = vld [vmem:[#allocation5 + $0x20] sm:$0xff]
    %v66 = vld [vmem:[#allocation5 + $0x28] sm:$0xff]
    %v67 = vld [vmem:[#allocation5 + $0x30] sm:$0xff]
    %v68 = vld [vmem:[#allocation5 + $0x38] sm:$0xff]
    %v69 = vld [vmem:[#allocation5 + $0x40] sm:$0xff]
    %v70 = vld [vmem:[#allocation5 + $0x48] sm:$0xff]
    %v71 = vld [vmem:[#allocation5 + $0x50] sm:$0xff]
    %v72 = vld [vmem:[#allocation5 + $0x58] sm:$0xff]
    %v73 = vld [vmem:[#allocation5 + $0x60] sm:$0xff]
    %v74 = vld [vmem:[#allocation5 + $0x68] sm:$0xff]
    %v75 = vld [vmem:[#allocation5 + $0x70] sm:$0xff]
    %v76 = vld [vmem:[#allocation5 + $0x78] sm:$0xff]
    %v77 = vld [vmem:[#allocation5 + $0x80] sm:$0xff]
    %v78 = vld [vmem:[#allocation5 + $0x88] sm:$0xff]
    %v79 = vld [vmem:[#allocation5 + $0x90] sm:$0xff]
    %v80 = vld [vmem:[#allocation5 + $0x98] sm:$0xff]
    %v81 = vld [vmem:[#allocation5 + $0xa0] sm:$0xff]
    %v82 = vld [vmem:[#allocation5 + $0xa8] sm:$0xff]
    %v83 = vld [vmem:[#allocation5 + $0xb0] sm:$0xff]
    %v84 = vld [vmem:[#allocation5 + $0xb8] sm:$0xff]
    %v85 = vld [vmem:[#allocation5 + $0xc0] sm:$0xff]
    %v86 = vld [vmem:[#allocation5 + $0xc8] sm:$0xff]
    %v87 = vld [vmem:[#allocation5 + $0xd0] sm:$0xff]
    %v88 = vld [vmem:[#allocation5 + $0xd8] sm:$0xff]
    %v89 = vld [vmem:[#allocation5 + $0xe0] sm:$0xff]
    %v90 = vld [vmem:[#allocation5 + $0xe8] sm:$0xff]
    %v91 = vld [vmem:[#allocation5 + $0xf0] sm:$0xff]
    %v92 = vld [vmem:[#allocation5 + $0xf8] sm:$0xff]
    %v93 = vperm.slane %v58, 0
    %v94 = vperm.slane %v59, 0
    %95 = vmatpush.msra.mxu0 %v91
    %96 = vmatpush.msra.mxu0 %v89
    %97 = vmatpush.msra.mxu0 %v87
    %98 = vmatpush.msra.mxu0 %v85
    %99 = vmatpush.msra.mxu0 %v83
    %100 = vmatpush.msra.mxu0 %v81
    %101 = vmatpush.msra.mxu0 %v79
    %102 = vmatpush.msra.mxu0 %v77
    %103 = vmatpush.msra.mxu0 %v75
    %104 = vmatpush.msra.mxu0 %v73
    %105 = vmatpush.msra.mxu0 %v71
    %106 = vmatpush.msra.mxu0 %v69
    %107 = vmatpush.msra.mxu0 %v67
    %108 = vmatpush.msra.mxu0 %v65
    %109 = vmatpush.msra.mxu0 %v63
    %110 = vmatpush.msra.mxu0 %v61
    %111 = vmatmul.f32.gmra.mxu0 %v60
    %v112 = vpop.f32.mrf.mxu0
    %v113 = vadd.f32 %v93, %v112
    %114 = vdwg.mxu0
    %115 = vmatpush.msra.mxu0 %v92
    %116 = vmatpush.msra.mxu0 %v90
    %117 = vmatpush.msra.mxu0 %v88
    %118 = vmatpush.msra.mxu0 %v86
    %119 = vmatpush.msra.mxu0 %v84
    %120 = vmatpush.msra.mxu0 %v82
    %121 = vmatpush.msra.mxu0 %v80
    %122 = vmatpush.msra.mxu0 %v78
    %123 = vmatpush.msra.mxu0 %v76
    %124 = vmatpush.msra.mxu0 %v74
    %125 = vmatpush.msra.mxu0 %v72
    %126 = vmatpush.msra.mxu0 %v70
    %127 = vmatpush.msra.mxu0 %v68
    %128 = vmatpush.msra.mxu0 %v66
    %129 = vmatpush.msra.mxu0 %v64
    %130 = vmatpush.msra.mxu0 %v62
    %131 = vmatmul.f32.gmra.mxu0 %v60
    %v132 = vpop.f32.mrf.mxu0
    %v133 = vadd.f32 %v94, %v132
    %134 = vdwg.mxu0
    %v135 = vxor.u32 %v113, 2147483648
    %v136 = vmul.f32 %v135, 1.442695
    %v137 = vpow.pop %v136
    %v138 = vadd.f32 %v137, 1.0
    %v139 = vrcp.pop %v138
    %v140 = vmul.f32 %v138, %v139
    %v141 = vsub.f32 1.0, %v140
    %v142 = vmul.f32 %v139, %v141
    %v143 = vadd.f32 %v139, %v142
    %vm144 = vweird.f32 %v138
    %vm145 = vweird.f32 %v139
    %vm146 = vmor %vm144, %vm145
    %v147 = vsel %vm146, %v139, %v143
    %v148 = vand.u32 2147483647, %v138
    %vm149 = vcmp.eq.f32.partialorder %v148, 8.507059e+37
    %v150 = vand.u32 %v138, 2147483648
    %v151 = vor.u32 1.1754944e-38, %v150
    %v152 = vsel %vm149, %v151, %v147
    %v153 = vmul.f32 1.0, %v152
    %v154 = vtanh.pop %v133
    %v155 = vmul.f32 %v153, %v154
    %156 = vmatpush.msra.mxu0 %v57
    %157 = vmatpush.msra.mxu0 %v56
    %158 = vmatpush.msra.mxu0 %v55
    %159 = vmatpush.msra.mxu0 %v54
    %160 = vmatpush.msra.mxu0 %v53
    %161 = vmatpush.msra.mxu0 %v52
    %162 = vmatpush.msra.mxu0 %v51
    %163 = vmatpush.msra.mxu0 %v50
    %164 = vmatpush.msra.mxu0 %v49
    %165 = vmatpush.msra.mxu0 %v48
    %166 = vmatpush.msra.mxu0 %v47
    %167 = vmatpush.msra.mxu0 %v46
    %168 = vmatpush.msra.mxu0 %v45
    %169 = vmatpush.msra.mxu0 %v44
    %170 = vmatpush.msra.mxu0 %v43
    %171 = vmatpush.msra.mxu0 %v42
    %172 = vmatmul.f32.gmra.mxu0 %v153
    %v173 = vpop.f32.mrf.mxu0
    %v174 = vadd.f32 0.0, %v173
    %175 = vdwg.mxu0
    %v176 = vtanh.pop %v155
    %v177 = vmul.f32 %v174, %v176
    %v178 = vld [vmem:[#allocation5 + $0x100] sm:$0xff]
    %v179 = vld [vmem:[#allocation5 + $0x108] sm:$0xff]
    %v180 = vld [vmem:[#allocation5 + $0x110] sm:$0xff]
    %v181 = vld [vmem:[#allocation5 + $0x118] sm:$0xff]
    %v182 = vld [vmem:[#allocation5 + $0x120] sm:$0xff]
    %v183 = vld [vmem:[#allocation5 + $0x128] sm:$0xff]
    %v184 = vld [vmem:[#allocation5 + $0x130] sm:$0xff]
    %v185 = vld [vmem:[#allocation5 + $0x138] sm:$0xff]
    %v186 = vld [vmem:[#allocation5 + $0x140] sm:$0xff]
    %v187 = vld [vmem:[#allocation5 + $0x148] sm:$0xff]
    %v188 = vld [vmem:[#allocation5 + $0x150] sm:$0xff]
    %v189 = vld [vmem:[#allocation5 + $0x158] sm:$0xff]
    %v190 = vld [vmem:[#allocation5 + $0x160] sm:$0xff]
    %v191 = vld [vmem:[#allocation5 + $0x168] sm:$0xff]
    %v192 = vld [vmem:[#allocation5 + $0x170] sm:$0xff]
    %v193 = vld [vmem:[#allocation5 + $0x178] sm:$0xff]
    %v194 = vld [vmem:[#allocation5 + $0x180] sm:$0xff]
    %v195 = vld [vmem:[#allocation5 + $0x188] sm:$0xff]
    %v196 = vld [vmem:[#allocation5 + $0x190] sm:$0xff]
    %v197 = vld [vmem:[#allocation5 + $0x198] sm:$0xff]
    %v198 = vld [vmem:[#allocation5 + $0x1a0] sm:$0xff]
    %v199 = vld [vmem:[#allocation5 + $0x1a8] sm:$0xff]
    %v200 = vld [vmem:[#allocation5 + $0x1b0] sm:$0xff]
    %v201 = vld [vmem:[#allocation5 + $0x1b8] sm:$0xff]
    %v202 = vld [vmem:[#allocation5 + $0x1c0] sm:$0xff]
    %v203 = vld [vmem:[#allocation5 + $0x1c8] sm:$0xff]
    %v204 = vld [vmem:[#allocation5 + $0x1d0] sm:$0xff]
    %v205 = vld [vmem:[#allocation5 + $0x1d8] sm:$0xff]
    %v206 = vld [vmem:[#allocation5 + $0x1e0] sm:$0xff]
    %v207 = vld [vmem:[#allocation5 + $0x1e8] sm:$0xff]
    %v208 = vld [vmem:[#allocation5 + $0x1f0] sm:$0xff]
    %v209 = vld [vmem:[#allocation5 + $0x1f8] sm:$0xff]
    %v210 = vperm.slane %v58, 1
    %v211 = vperm.slane %v59, 1
    %212 = vmatpush.msra.mxu0 %v208
    %213 = vmatpush.msra.mxu0 %v206
    %214 = vmatpush.msra.mxu0 %v204
    %215 = vmatpush.msra.mxu0 %v202
    %216 = vmatpush.msra.mxu0 %v200
    %217 = vmatpush.msra.mxu0 %v198
    %218 = vmatpush.msra.mxu0 %v196
    %219 = vmatpush.msra.mxu0 %v194
    %220 = vmatpush.msra.mxu0 %v192
    %221 = vmatpush.msra.mxu0 %v190
    %222 = vmatpush.msra.mxu0 %v188
    %223 = vmatpush.msra.mxu0 %v186
    %224 = vmatpush.msra.mxu0 %v184
    %225 = vmatpush.msra.mxu0 %v182
    %226 = vmatpush.msra.mxu0 %v180
    %227 = vmatpush.msra.mxu0 %v178
    %228 = vmatmul.f32.gmra.mxu0 %v177
    %v229 = vpop.f32.mrf.mxu0
    %v230 = vadd.f32 %v210, %v229
    %231 = vdwg.mxu0
    %232 = vmatpush.msra.mxu0 %v209
    %233 = vmatpush.msra.mxu0 %v207
    %234 = vmatpush.msra.mxu0 %v205
    %235 = vmatpush.msra.mxu0 %v203
    %236 = vmatpush.msra.mxu0 %v201
    %237 = vmatpush.msra.mxu0 %v199
    %238 = vmatpush.msra.mxu0 %v197
    %239 = vmatpush.msra.mxu0 %v195
    %240 = vmatpush.msra.mxu0 %v193
    %241 = vmatpush.msra.mxu0 %v191
    %242 = vmatpush.msra.mxu0 %v189
    %243 = vmatpush.msra.mxu0 %v187
    %244 = vmatpush.msra.mxu0 %v185
    %245 = vmatpush.msra.mxu0 %v183
    %246 = vmatpush.msra.mxu0 %v181
    %247 = vmatpush.msra.mxu0 %v179
    %248 = vmatmul.f32.gmra.mxu0 %v177
    %v249 = vpop.f32.mrf.mxu0
    %v250 = vadd.f32 %v211, %v249
    %251 = vdwg.mxu0
    %v252 = vxor.u32 %v230, 2147483648
    %v253 = vmul.f32 %v252, 1.442695
    %v254 = vpow.pop %v253
    %v255 = vadd.f32 %v254, 1.0
    %v256 = vrcp.pop %v255
    %v257 = vmul.f32 %v255, %v256
    %v258 = vsub.f32 1.0, %v257
    %v259 = vmul.f32 %v256, %v258
    %v260 = vadd.f32 %v256, %v259
    %vm261 = vweird.f32 %v255
    %vm262 = vweird.f32 %v256
    %vm263 = vmor %vm261, %vm262
    %v264 = vsel %vm263, %v256, %v260
    %v265 = vand.u32 2147483647, %v255
    %vm266 = vcmp.eq.f32.partialorder %v265, 8.507059e+37
    %v267 = vand.u32 %v255, 2147483648
    %v268 = vor.u32 1.1754944e-38, %v267
    %v269 = vsel %vm266, %v268, %v264
    %v270 = vmul.f32 1.0, %v269
    %v271 = vtanh.pop %v250
    %v272 = vmul.f32 %v270, %v271
    %273 = vmatpush.msra.mxu0 %v57
    %274 = vmatpush.msra.mxu0 %v56
    %275 = vmatpush.msra.mxu0 %v55
    %276 = vmatpush.msra.mxu0 %v54
    %277 = vmatpush.msra.mxu0 %v53
    %278 = vmatpush.msra.mxu0 %v52
    %279 = vmatpush.msra.mxu0 %v51
    %280 = vmatpush.msra.mxu0 %v50
    %281 = vmatpush.msra.mxu0 %v49
    %282 = vmatpush.msra.mxu0 %v48
    %283 = vmatpush.msra.mxu0 %v47
    %284 = vmatpush.msra.mxu0 %v46
    %285 = vmatpush.msra.mxu0 %v45
    %286 = vmatpush.msra.mxu0 %v44
    %287 = vmatpush.msra.mxu0 %v43
    %288 = vmatpush.msra.mxu0 %v42
    %289 = vmatmul.f32.gmra.mxu0 %v270
    %v290 = vpop.f32.mrf.mxu0
    %v291 = vadd.f32 0.0, %v290
    %292 = vdwg.mxu0
    %v293 = vtanh.pop %v272
    %v294 = vmul.f32 %v291, %v293
    %v295 = vld [vmem:[#allocation5 + $0x200] sm:$0xff]
    %v296 = vld [vmem:[#allocation5 + $0x208] sm:$0xff]
    %v297 = vld [vmem:[#allocation5 + $0x210] sm:$0xff]
    %v298 = vld [vmem:[#allocation5 + $0x218] sm:$0xff]
    %v299 = vld [vmem:[#allocation5 + $0x220] sm:$0xff]
    %v300 = vld [vmem:[#allocation5 + $0x228] sm:$0xff]
    %v301 = vld [vmem:[#allocation5 + $0x230] sm:$0xff]
    %v302 = vld [vmem:[#allocation5 + $0x238] sm:$0xff]
    %v303 = vld [vmem:[#allocation5 + $0x240] sm:$0xff]
    %v304 = vld [vmem:[#allocation5 + $0x248] sm:$0xff]
    %v305 = vld [vmem:[#allocation5 + $0x250] sm:$0xff]
    %v306 = vld [vmem:[#allocation5 + $0x258] sm:$0xff]
    %v307 = vld [vmem:[#allocation5 + $0x260] sm:$0xff]
    %v308 = vld [vmem:[#allocation5 + $0x268] sm:$0xff]
    %v309 = vld [vmem:[#allocation5 + $0x270] sm:$0xff]
    %v310 = vld [vmem:[#allocation5 + $0x278] sm:$0xff]
    %v311 = vld [vmem:[#allocation5 + $0x280] sm:$0xff]
    %v312 = vld [vmem:[#allocation5 + $0x288] sm:$0xff]
    %v313 = vld [vmem:[#allocation5 + $0x290] sm:$0xff]
    %v314 = vld [vmem:[#allocation5 + $0x298] sm:$0xff]
    %v315 = vld [vmem:[#allocation5 + $0x2a0] sm:$0xff]
    %v316 = vld [vmem:[#allocation5 + $0x2a8] sm:$0xff]
    %v317 = vld [vmem:[#allocation5 + $0x2b0] sm:$0xff]
    %v318 = vld [vmem:[#allocation5 + $0x2b8] sm:$0xff]
    %v319 = vld [vmem:[#allocation5 + $0x2c0] sm:$0xff]
    %v320 = vld [vmem:[#allocation5 + $0x2c8] sm:$0xff]
    %v321 = vld [vmem:[#allocation5 + $0x2d0] sm:$0xff]
    %v322 = vld [vmem:[#allocation5 + $0x2d8] sm:$0xff]
    %v323 = vld [vmem:[#allocation5 + $0x2e0] sm:$0xff]
    %v324 = vld [vmem:[#allocation5 + $0x2e8] sm:$0xff]
    %v325 = vld [vmem:[#allocation5 + $0x2f0] sm:$0xff]
    %v326 = vld [vmem:[#allocation5 + $0x2f8] sm:$0xff]
    %v327 = vperm.slane %v58, 2
    %v328 = vperm.slane %v59, 2
    %329 = vmatpush.msra.mxu0 %v325
    %330 = vmatpush.msra.mxu0 %v323
    %331 = vmatpush.msra.mxu0 %v321
    %332 = vmatpush.msra.mxu0 %v319
    %333 = vmatpush.msra.mxu0 %v317
    %334 = vmatpush.msra.mxu0 %v315
    %335 = vmatpush.msra.mxu0 %v313
    %336 = vmatpush.msra.mxu0 %v311
    %337 = vmatpush.msra.mxu0 %v309
    %338 = vmatpush.msra.mxu0 %v307
    %339 = vmatpush.msra.mxu0 %v305
    %340 = vmatpush.msra.mxu0 %v303
    %341 = vmatpush.msra.mxu0 %v301
    %342 = vmatpush.msra.mxu0 %v299
    %343 = vmatpush.msra.mxu0 %v297
    %344 = vmatpush.msra.mxu0 %v295
    %345 = vmatmul.f32.gmra.mxu0 %v294
    %v346 = vpop.f32.mrf.mxu0
    %v347 = vadd.f32 %v327, %v346
    %348 = vdwg.mxu0
    %349 = vmatpush.msra.mxu0 %v326
    %350 = vmatpush.msra.mxu0 %v324
    %351 = vmatpush.msra.mxu0 %v322
    %352 = vmatpush.msra.mxu0 %v320
    %353 = vmatpush.msra.mxu0 %v318
    %354 = vmatpush.msra.mxu0 %v316
    %355 = vmatpush.msra.mxu0 %v314
    %356 = vmatpush.msra.mxu0 %v312
    %357 = vmatpush.msra.mxu0 %v310
    %358 = vmatpush.msra.mxu0 %v308
    %359 = vmatpush.msra.mxu0 %v306
    %360 = vmatpush.msra.mxu0 %v304
    %361 = vmatpush.msra.mxu0 %v302
    %362 = vmatpush.msra.mxu0 %v300
    %363 = vmatpush.msra.mxu0 %v298
    %364 = vmatpush.msra.mxu0 %v296
    %365 = vmatmul.f32.gmra.mxu0 %v294
    %v366 = vpop.f32.mrf.mxu0
    %v367 = vadd.f32 %v328, %v366
    %368 = vdwg.mxu0
    %v369 = vxor.u32 %v347, 2147483648
    %v370 = vmul.f32 %v369, 1.442695
    %v371 = vpow.pop %v370
    %v372 = vadd.f32 %v371, 1.0
    %v373 = vrcp.pop %v372
    %v374 = vmul.f32 %v372, %v373
    %v375 = vsub.f32 1.0, %v374
    %v376 = vmul.f32 %v373, %v375
    %v377 = vadd.f32 %v373, %v376
    %vm378 = vweird.f32 %v372
    %vm379 = vweird.f32 %v373
    %vm380 = vmor %vm378, %vm379
    %v381 = vsel %vm380, %v373, %v377
    %v382 = vand.u32 2147483647, %v372
    %vm383 = vcmp.eq.f32.partialorder %v382, 8.507059e+37
    %v384 = vand.u32 %v372, 2147483648
    %v385 = vor.u32 1.1754944e-38, %v384
    %v386 = vsel %vm383, %v385, %v381
    %v387 = vmul.f32 1.0, %v386
    %v388 = vtanh.pop %v367
    %v389 = vmul.f32 %v387, %v388
    %390 = vmatpush.msra.mxu0 %v57
    %391 = vmatpush.msra.mxu0 %v56
    %392 = vmatpush.msra.mxu0 %v55
    %393 = vmatpush.msra.mxu0 %v54
    %394 = vmatpush.msra.mxu0 %v53
    %395 = vmatpush.msra.mxu0 %v52
    %396 = vmatpush.msra.mxu0 %v51
    %397 = vmatpush.msra.mxu0 %v50
    %398 = vmatpush.msra.mxu0 %v49
    %399 = vmatpush.msra.mxu0 %v48
    %400 = vmatpush.msra.mxu0 %v47
    %401 = vmatpush.msra.mxu0 %v46
    %402 = vmatpush.msra.mxu0 %v45
    %403 = vmatpush.msra.mxu0 %v44
    %404 = vmatpush.msra.mxu0 %v43
    %405 = vmatpush.msra.mxu0 %v42
    %406 = vmatmul.f32.gmra.mxu0 %v387
    %v407 = vpop.f32.mrf.mxu0
    %v408 = vadd.f32 0.0, %v407
    %409 = vdwg.mxu0
    %v410 = vtanh.pop %v389
    %v411 = vmul.f32 %v408, %v410
    %v412 = vld [vmem:[#allocation5 + $0x300] sm:$0xff]
    %v413 = vld [vmem:[#allocation5 + $0x310] sm:$0xff]
    %v414 = vld [vmem:[#allocation5 + $0x320] sm:$0xff]
    %v415 = vld [vmem:[#allocation5 + $0x330] sm:$0xff]
    %v416 = vld [vmem:[#allocation5 + $0x340] sm:$0xff]
    %v417 = vld [vmem:[#allocation5 + $0x350] sm:$0xff]
    %v418 = vld [vmem:[#allocation5 + $0x360] sm:$0xff]
    %v419 = vld [vmem:[#allocation5 + $0x370] sm:$0xff]
    %v420 = vld [vmem:[#allocation5 + $0x380] sm:$0xff]
    %v421 = vld [vmem:[#allocation5 + $0x390] sm:$0xff]
    %v422 = vld [vmem:[#allocation5 + $0x3a0] sm:$0xff]
    %v423 = vld [vmem:[#allocation5 + $0x3b0] sm:$0xff]
    %v424 = vld [vmem:[#allocation5 + $0x3c0] sm:$0xff]
    %v425 = vld [vmem:[#allocation5 + $0x3d0] sm:$0xff]
    %v426 = vld [vmem:[#allocation5 + $0x3e0] sm:$0xff]
    %v427 = vld [vmem:[#allocation5 + $0x3f0] sm:$0xff]
    %v428 = vperm.slane %v58, 3
    %429 = vmatpush.msra.mxu0 %v427
    %430 = vmatpush.msra.mxu0 %v426
    %431 = vmatpush.msra.mxu0 %v425
    %432 = vmatpush.msra.mxu0 %v424
    %433 = vmatpush.msra.mxu0 %v423
    %434 = vmatpush.msra.mxu0 %v422
    %435 = vmatpush.msra.mxu0 %v421
    %436 = vmatpush.msra.mxu0 %v420
    %437 = vmatpush.msra.mxu0 %v419
    %438 = vmatpush.msra.mxu0 %v418
    %439 = vmatpush.msra.mxu0 %v417
    %440 = vmatpush.msra.mxu0 %v416
    %441 = vmatpush.msra.mxu0 %v415
    %442 = vmatpush.msra.mxu0 %v414
    %443 = vmatpush.msra.mxu0 %v413
    %444 = vmatpush.msra.mxu0 %v412
    %445 = vmatmul.f32.gmra.mxu0 %v411
    %v446 = vpop.f32.mrf.mxu0
    %v447 = vadd.f32 %v428, %v446
    %448 = vdwg.mxu0
    %449 = vst [vmem:[#allocation7] sm:$0xff] %v447
    // Predicated region
    $region18: #{tpu_custom_call.1} parent=1 // pred_check
      _
    $region19: #{tpu_custom_call.1} parent=1 // pred_check_branch
      %451 = sbr.rel (0) target = $region21
    $region20: #{tpu_custom_call.1} parent=1 // pred_region
      %453 = vsyncadd [#allocation4], 0
      %s455 = sshll.u32 [#allocation7], 4
      %s456 = int_to_ptr.vmem [resolvable:$true] %s455
      %s457 = sshll.u32 %s2, 4
      %s458 = int_to_ptr.hbm [resolvable:$true] %s457
      %460 = dma.vmem_to_hbm [thread:$0]  %s456, 128, %s458, [#allocation4]
    $region21: #{tpu_custom_call.1} parent=1 // pred_fallthru
      _
    // Predicated region
    $region22: #{tpu_custom_call.1} parent=1 // pred_check
      _
    $region23: #{tpu_custom_call.1} parent=1 // pred_check_branch
      %462 = sbr.rel (0) target = $region25
    $region24: #{tpu_custom_call.1} parent=1 // pred_region
      %464 = dma.done [#allocation4], 128
    $region25: #{tpu_custom_call.1} parent=1 // pred_fallthru
      _
    %465 = vsyncpa [#allocation3], 1
    %466 = vsyncpa [#allocation6], 1
    %467 = vsyncpa [#allocation4], 1

</llo_original>
